<compile_context>
chip_gen: v6e
topology: v6e:2x2x1
jax: 0.10.0
libtpu: 0.0.40
codegen_flags: <defaults>
</compile_context>

<pallas_src>
import functools

import jax
import jax.numpy as jnp
from jax import lax
from jax.experimental import pallas as pl
from jax.experimental.pallas import tpu as pltpu

# ---- "opts" (synthetic, small) ----------------------------------------------
NUM_INS = 4                           # opts.num_ins
OUTPUT_SIZE = NUM_INS + 3 * NUM_INS   # 4 * num_ins = 16
K_TEMPORAL = 3                        # temporal (causal) conv kernel size
FEAT = 32                             # CNN feature dim fed to the temporal head
HIDDEN = 32                           # temporal head hidden width
B = 2                                 # batch
S = 8                                 # sequence length

# ---- packed-parameter / tiling layout ----------------------------------------
HALO = 8                              # halo rows per tile (>= 2*(K-1)=4, 8-aligned)
PACK_COLS = 32                        # packed slab lane width (= HIDDEN = 2*OUTPUT_SIZE)
WC1_OFF = 0                                         # 3 stage-1 conv taps (FEAT rows each)
WC2_OFF = WC1_OFF + K_TEMPORAL * FEAT               # 3 stage-2 conv taps (padded to PACK_COLS rows)
WO1_OFF = WC2_OFF + K_TEMPORAL * PACK_COLS          # stage-1 projection (logits -> lanes [0,16))
WO2_OFF = WO1_OFF + HIDDEN                          # stage-2 projection (logits -> lanes [16,32))
BIAS_OFF = WO2_OFF + HIDDEN                         # 8-row bias block
P_ROWS = BIAS_OFF + 8

assert HIDDEN == PACK_COLS and 2 * OUTPUT_SIZE == PACK_COLS
assert FEAT % 8 == 0 and HALO % 8 == 0 and HALO >= 2 * (K_TEMPORAL - 1)


# ---- the Pallas kernel: fused 2-stage temporal head over one row tile --------
def _temporal_head_kernel(halo_ref, x_ref, p_ref, out_ref, *, seq_len, compute_dtype):
    tile_rows = x_ref.shape[0]
    n_ext = tile_rows + HALO
    i = pl.program_id(0)

    # Extended tile: [last HALO rows of the previous tile | this tile].
    x_ext = jnp.concatenate([halo_ref[...], x_ref[...]], axis=0)       # (n_ext, FEAT)

    # Causal-validity masks, shared by both stages.  Ext row r is global row
    # g = i*tile_rows - HALO + r; a tap with causal offset d is valid iff
    # (g % seq_len) >= d  (zero left-padding at the start of every video).
    # Halo rows with negative / stale g (first tile, clamped halo block) only
    # produce values that are never used: only ext rows >= HALO - 2*(K-1) feed
    # the stored rows, and their masks are exact.
    g = i * tile_rows - HALO + lax.broadcasted_iota(jnp.int32, (n_ext, 1), 0)
    gmod = g % seq_len
    m1 = (gmod >= 1).astype(jnp.float32)
    m2 = (gmod >= 2).astype(jnp.float32)

    def shift(v, d, m):
        # shifted[r] = v[r - d]; rows r < d wrap but are masked / never used.
        return pltpu.roll(v, shift=d, axis=0) * m

    bias = p_ref[pl.ds(BIAS_OFF, 8), :]                                # one aligned (8,32) load
    bc1 = bias[0:1, :]
    bc2 = bias[1:2, :]
    bo1 = bias[2:3, :]
    bo2 = bias[3:4, :]

    def causal_conv_relu(v, w_off, b):
        # Three accumulated dots with static weight slices (tap k has causal
        # offset d = K-1-k) — no lane-axis concat, no (rows, 3C) temporary.
        c = v.shape[1]
        acc = b                                                        # (1, 32) f32, broadcasts
        for k, d, m in ((0, 2, m2), (1, 1, m1), (2, 0, None)):
            w = p_ref[pl.ds(w_off + k * c, c), :].astype(compute_dtype)
            tap = v if d == 0 else shift(v, d, m)
            acc = acc + jnp.dot(tap.astype(compute_dtype), w,
                                preferred_element_type=jnp.float32)
        return jnp.maximum(acc, 0.0)

    # Stage 1: causal conv -> ReLU -> projection (logits land in lanes [0,16)).
    h1 = causal_conv_relu(x_ext, WC1_OFF, bc1)
    wo1 = p_ref[pl.ds(WO1_OFF, HIDDEN), :].astype(compute_dtype)
    slab1 = jnp.dot(h1.astype(compute_dtype), wo1,
                    preferred_element_type=jnp.float32) + bo1          # (n_ext, 32)

    # Stage 2: refinement conv on stage-1 logits (logits land in lanes [16,32)).
    h2 = causal_conv_relu(slab1, WC2_OFF, bc2)
    wo2 = p_ref[pl.ds(WO2_OFF, HIDDEN), :].astype(compute_dtype)
    slab2 = jnp.dot(h2.astype(compute_dtype), wo2,
                    preferred_element_type=jnp.float32) + bo2          # (n_ext, 32)

    # Disjoint lane ranges -> one add, drop the halo rows, single dense store
    # (last dim == full output dim: no 4x lane-padding on the output stream).
    out_ref[...] = (slab1 + slab2)[HALO:, :].astype(out_ref.dtype)


# ---- wrapper-side helpers (layout plumbing, plain JAX) -----------------------
def _pack_params(params):
    """Pack all weights/biases into one (P_ROWS, 32) f32 slab (single DMA)."""
    wc1, bc1, wo1, bo1, wc2, bc2, wo2, bo2 = params
    p = jnp.zeros((P_ROWS, PACK_COLS), jnp.float32)
    # stage-1 conv taps (FEAT input channels each)
    p = p.at[WC1_OFF:WC1_OFF + K_TEMPORAL * FEAT, :HIDDEN].set(wc1)
    # stage-2 conv taps, input channels zero-padded OUTPUT_SIZE -> PACK_COLS
    for k in range(K_TEMPORAL):
        p = p.at[WC2_OFF + k * PACK_COLS:WC2_OFF + k * PACK_COLS + OUTPUT_SIZE,
                 :HIDDEN].set(wc2[k * OUTPUT_SIZE:(k + 1) * OUTPUT_SIZE, :])
    # output projections, zero-padded into disjoint lane ranges of the 32-wide slab
    p = p.at[WO1_OFF:WO1_OFF + HIDDEN, 0:OUTPUT_SIZE].set(wo1)
    p = p.at[WO2_OFF:WO2_OFF + HIDDEN, OUTPUT_SIZE:2 * OUTPUT_SIZE].set(wo2)
    # biases as extra rows
    p = p.at[BIAS_OFF + 0, :HIDDEN].set(bc1[0])
    p = p.at[BIAS_OFF + 1, :HIDDEN].set(bc2[0])
    p = p.at[BIAS_OFF + 2, 0:OUTPUT_SIZE].set(bo1[0])
    p = p.at[BIAS_OFF + 3, OUTPUT_SIZE:2 * OUTPUT_SIZE].set(bo2[0])
    return p


def _choose_tile_rows(n):
    # ~1-2K rows keeps the double-buffered working set (tile + halo + output +
    # in-kernel temps, ~1.5 KB/row at FEAT=32) far under the ~32 MiB scoped
    # VMEM that is safe on every generation (v7x: 64 MiB physical, 32 MiB
    # scoped default), while amortizing the ~0.35 us/step grid overhead.  On
    # v5e/v6e (128 MiB VMEM) this could be pushed higher with vmem_limit_bytes.
    for cand in (2048, 1024, 512, 256, 128, 64, 32, 16, 8):
        if n % cand == 0:
            return cand
    return n


def temporal_head(x, params, *, tile_rows=None, compute_dtype=jnp.float32):
    """x: (B, S, FEAT) f32 features -> list of 2 stage outputs, each (B, S, 4*num_ins)."""
    b_, s_, f_ = x.shape
    n = b_ * s_
    assert f_ == FEAT
    assert n % 8 == 0, "flattened B*S must be a multiple of 8"
    if tile_rows is None:
        tile_rows = _choose_tile_rows(n)
    assert tile_rows % 8 == 0 and n % tile_rows == 0

    x2 = x.reshape(n, f_)
    packed = _pack_params(params)
    halo_blocks_per_tile = tile_rows // HALO

    in_specs = [
        # last HALO rows of the previous tile (clamped to block 0 for the first
        # tile; those rows are garbage but fully masked in-kernel).
        pl.BlockSpec((HALO, f_),
                     lambda i: (jnp.maximum(i * halo_blocks_per_tile - 1, 0), 0)),
        # the tile itself.  (If DMA is still exposed on v7x at large tiles,
        # pipeline_mode=pl.Buffered(3) on this spec is the next knob to sweep.)
        pl.BlockSpec((tile_rows, f_), lambda i: (i, 0)),
        # packed weights/biases: constant block index -> VMEM-resident across steps.
        pl.BlockSpec((P_ROWS, PACK_COLS), lambda i: (0, 0)),
    ]
    out_specs = pl.BlockSpec((tile_rows, 2 * OUTPUT_SIZE), lambda i: (i, 0))

    out = pl.pallas_call(
        functools.partial(_temporal_head_kernel, seq_len=s_, compute_dtype=compute_dtype),
        out_shape=jax.ShapeDtypeStruct((n, 2 * OUTPUT_SIZE), jnp.float32),
        grid=(n // tile_rows,),
        in_specs=in_specs,
        out_specs=out_specs,
        compiler_params=pltpu.CompilerParams(
            dimension_semantics=("parallel",),      # independent tiles; v7x megacore sharding
            vmem_limit_bytes=32 * 1024 * 1024,      # safe on v5e/v6e/v7x at these tile sizes
        ),
    )(x2, x2, packed)

    out = out.reshape(b_, s_, 2 * OUTPUT_SIZE)
    return [out[..., :OUTPUT_SIZE], out[..., OUTPUT_SIZE:]]


# ---- structure_prediction (glue, matches the PyTorch slicing exactly) --------
def structure_prediction(output, num_ins):
    b_, s_, _ = output.shape
    output_reg = output[:, :, -num_ins:]                              # (B, S, num_ins)
    output_cls = output[:, :, :-num_ins].reshape(b_, s_, 3, num_ins)  # (B, S, 3, num_ins)
    return (output_reg, output_cls)


def anticipation_forward(data, params, *, tile_rows=None, compute_dtype=jnp.float32):
    # == AnticipationModel.forward with opts.only_temporal=True
    output = temporal_head(data, params, tile_rows=tile_rows, compute_dtype=compute_dtype)
    return [structure_prediction(out, NUM_INS) for out in output]


# ---- pure-JAX reference of the same temporal head (correctness check) --------
def temporal_head_reference(x, params):
    wc1, bc1, wo1, bo1, wc2, bc2, wo2, bo2 = params
    hp = lax.Precision.HIGHEST

    def causal_conv(inp, w, bias):
        bn, sn, cn = inp.shape
        acc = jnp.broadcast_to(bias, (bn, sn, w.shape[1])).astype(jnp.float32)
        for k in range(K_TEMPORAL):
            d = K_TEMPORAL - 1 - k
            if d == 0:
                shifted = inp
            else:
                shifted = jnp.concatenate(
                    [jnp.zeros((bn, d, cn), inp.dtype), inp[:, :sn - d, :]], axis=1)
            acc = acc + jnp.einsum('bsc,ch->bsh', shifted,
                                   w[k * cn:(k + 1) * cn, :], precision=hp)
        return acc

    h1 = jnp.maximum(causal_conv(x, wc1, bc1), 0.0)
    o1 = jnp.einsum('bsh,ho->bso', h1, wo1, precision=hp) + bo1
    h2 = jnp.maximum(causal_conv(o1, wc2, bc2), 0.0)
    o2 = jnp.einsum('bsh,ho->bso', h2, wo2, precision=hp) + bo2
    return [o1, o2]


# ---- deterministic parameter init -------------------------------------------
def init_params(key):
    ks = jax.random.split(key, 8)
    scale = 0.1
    wc1 = scale * jax.random.normal(ks[0], (K_TEMPORAL * FEAT, HIDDEN), jnp.float32)
    bc1 = scale * jax.random.normal(ks[1], (1, HIDDEN), jnp.float32)
    wo1 = scale * jax.random.normal(ks[2], (HIDDEN, OUTPUT_SIZE), jnp.float32)
    bo1 = scale * jax.random.normal(ks[3], (1, OUTPUT_SIZE), jnp.float32)
    wc2 = scale * jax.random.normal(ks[4], (K_TEMPORAL * OUTPUT_SIZE, HIDDEN), jnp.float32)
    bc2 = scale * jax.random.normal(ks[5], (1, HIDDEN), jnp.float32)
    wo2 = scale * jax.random.normal(ks[6], (HIDDEN, OUTPUT_SIZE), jnp.float32)
    bo2 = scale * jax.random.normal(ks[7], (1, OUTPUT_SIZE), jnp.float32)
    return (wc1, bc1, wo1, bo1, wc2, bc2, wo2, bo2)


if __name__ == "__main__":
    key = jax.random.PRNGKey(0)
    k_data, k_params = jax.random.split(key)

    # Pre-extracted CNN features (the `only_temporal` input path).
    data = jax.random.normal(k_data, (B, S, FEAT), jnp.float32)
    params = init_params(k_params)

    # TODO(synk): the image-based CNN / TemporalCNN backbone (ResNet/NFNet
    # feature extractor) and all training-side machinery (losses, optimizer,
    # checkpoints, metric meters) are outside this forward path and are not
    # reproduced; only the only_temporal head + structure_prediction forward
    # semantics are implemented.
    fwd = jax.jit(functools.partial(anticipation_forward, tile_rows=8))
    outputs = fwd(data, params)
    jax.block_until_ready(outputs)

    # sanity: 2 stages, each (reg (B,S,num_ins), cls (B,S,3,num_ins))
    assert len(outputs) == 2
    for reg, cls in outputs:
        assert reg.shape == (B, S, NUM_INS)
        assert cls.shape == (B, S, 3, NUM_INS)

    # numeric check against a pure-JAX reference of the same head
    ref_heads = temporal_head_reference(data, params)
    for (reg, cls), ref_out in zip(outputs, ref_heads):
        ref_reg = ref_out[:, :, -NUM_INS:]
        ref_cls = ref_out[:, :, :-NUM_INS].reshape(B, S, 3, NUM_INS)
        assert float(jnp.max(jnp.abs(reg - ref_reg))) < 1e-2
        assert float(jnp.max(jnp.abs(cls - ref_cls))) < 1e-2

    # extra tiling/halo/mask checks: batch boundary inside a tile (S=12) and a
    # long single-video sequence crossing several tiles (S=32).
    for b2, s2 in ((2, 12), (1, 32)):
        d2 = jax.random.normal(jax.random.fold_in(k_data, 100 * s2 + b2),
                               (b2, s2, FEAT), jnp.float32)
        got = temporal_head(d2, params, tile_rows=8)
        ref = temporal_head_reference(d2, params)
        for g_out, r_out in zip(got, ref):
            assert float(jnp.max(jnp.abs(g_out - r_out))) < 1e-2

    print("KERNEL_OK")
</pallas_src>

<mosaic_0001>
module attributes {stable_mosaic.version = 11 : i64} {
  func.func @_temporal_head_kernel(%arg0: i32, %arg1: memref<8x32xf32, #tpu.memory_space<vmem>>, %arg2: memref<8x32xf32, #tpu.memory_space<vmem>>, %arg3: memref<264x32xf32, #tpu.memory_space<vmem>>, %arg4: memref<8x32xf32, #tpu.memory_space<vmem>>) attributes {dimension_semantics = [#tpu.dimension_semantics<parallel>], iteration_bounds = array<i64: 2>, scalar_prefetch = 0 : i64, scratch_operands = 0 : i64, tpu.core_type = #tpu.core_type<tc>, window_params = [{transform_indices = @transform_0, window_bounds = array<i64: 8, 32>}, {transform_indices = @transform_1, window_bounds = array<i64: 8, 32>}, {pipeline_mode = #tpu.pipeline_mode<synchronous>, transform_indices = @transform_2, window_bounds = array<i64: 264, 32>}, {transform_indices = @transform_3, window_bounds = array<i64: 8, 32>}]} {
    %c0 = arith.constant 0 : index
    %c0_0 = arith.constant 0 : index
    %0 = vector.load %arg1[%c0, %c0_0] : memref<8x32xf32, #tpu.memory_space<vmem>>, vector<8x32xf32>
    %c0_1 = arith.constant 0 : index
    %c0_2 = arith.constant 0 : index
    %1 = vector.load %arg2[%c0_1, %c0_2] : memref<8x32xf32, #tpu.memory_space<vmem>>, vector<8x32xf32>
    %2 = tpu.concatenate %0, %1 in 0 : vector<8x32xf32>, vector<8x32xf32> -> vector<16x32xf32>
    %c8_i32 = arith.constant 8 : i32
    %3 = arith.muli %arg0, %c8_i32 : i32
    %c8_i32_3 = arith.constant 8 : i32
    %4 = arith.subi %3, %c8_i32_3 : i32
    %5 = tpu.iota {dimensions = array<i32: 0>} : vector<16x1xi32>
    %6 = vector.broadcast %4 : i32 to vector<16x1xi32>
    %7 = arith.addi %6, %5 : vector<16x1xi32>
    %c8_i32_4 = arith.constant 8 : i32
    %c0_i32 = arith.constant 0 : i32
    %8 = arith.cmpi eq, %c8_i32_4, %c0_i32 : i32
    %c1_i32 = arith.constant 1 : i32
    %9 = arith.select %8, %c1_i32, %c8_i32_4 : i32
    %10 = vector.broadcast %9 : i32 to vector<16x1xi32>
    %11 = arith.remsi %7, %10 : vector<16x1xi32>
    %c0_i32_5 = arith.constant 0 : i32
    %12 = vector.broadcast %c0_i32_5 : i32 to vector<16x1xi32>
    %13 = arith.cmpi ne, %11, %12 : vector<16x1xi32>
    %c0_i32_6 = arith.constant 0 : i32
    %14 = vector.broadcast %c0_i32_6 : i32 to vector<16x1xi32>
    %15 = arith.cmpi slt, %11, %14 : vector<16x1xi32>
    %c0_i32_7 = arith.constant 0 : i32
    %16 = arith.cmpi slt, %9, %c0_i32_7 : i32
    %17 = vector.broadcast %16 : i1 to vector<16x1xi1>
    %18 = vector.broadcast %17 : vector<16x1xi1> to vector<16x1xi1>
    %19 = arith.xori %15, %18 : vector<16x1xi1>
    %20 = arith.andi %19, %13 : vector<16x1xi1>
    %21 = vector.broadcast %9 : i32 to vector<16x1xi32>
    %22 = arith.addi %11, %21 : vector<16x1xi32>
    %23 = arith.select %20, %22, %11 : vector<16x1xi1>, vector<16x1xi32>
    %c1_i32_8 = arith.constant 1 : i32
    %24 = vector.broadcast %c1_i32_8 : i32 to vector<16x1xi32>
    %25 = arith.cmpi sge, %23, %24 : vector<16x1xi32>
    %26 = arith.extui %25 : vector<16x1xi1> to vector<16x1xi32>
    %27 = arith.sitofp %26 : vector<16x1xi32> to vector<16x1xf32>
    %c2_i32 = arith.constant 2 : i32
    %28 = vector.broadcast %c2_i32 : i32 to vector<16x1xi32>
    %29 = arith.cmpi sge, %23, %28 : vector<16x1xi32>
    %30 = arith.extui %29 : vector<16x1xi1> to vector<16x1xi32>
    %31 = arith.sitofp %30 : vector<16x1xi32> to vector<16x1xf32>
    %c256 = arith.constant 256 : index
    %c0_9 = arith.constant 0 : index
    %32 = vector.load %arg3[%c256, %c0_9] : memref<264x32xf32, #tpu.memory_space<vmem>>, vector<8x32xf32>
    %33 = vector.extract_strided_slice %32 {offsets = [0, 0], sizes = [1, 32], strides = [1, 1]} : vector<8x32xf32> to vector<1x32xf32>
    %34 = vector.extract_strided_slice %32 {offsets = [1, 0], sizes = [1, 32], strides = [1, 1]} : vector<8x32xf32> to vector<1x32xf32>
    %35 = vector.extract_strided_slice %32 {offsets = [2, 0], sizes = [1, 32], strides = [1, 1]} : vector<8x32xf32> to vector<1x32xf32>
    %36 = vector.extract_strided_slice %32 {offsets = [3, 0], sizes = [1, 32], strides = [1, 1]} : vector<8x32xf32> to vector<1x32xf32>
    %c0_10 = arith.constant 0 : index
    %c0_11 = arith.constant 0 : index
    %37 = vector.load %arg3[%c0_10, %c0_11] : memref<264x32xf32, #tpu.memory_space<vmem>>, vector<32x32xf32>
    %c2_i32_12 = arith.constant 2 : i32
    %38 = tpu.dynamic_rotate %2 by %c2_i32_12 dim 0 : vector<16x32xf32>, i32 -> vector<16x32xf32>
    %39 = vector.broadcast %31 : vector<16x1xf32> to vector<16x32xf32>
    %40 = arith.mulf %38, %39 : vector<16x32xf32>
    %cst = arith.constant dense<0.000000e+00> : vector<16x32xf32>
    %41 = tpu.matmul %40, %37, %cst {dimension_numbers = #tpu.dot_dimension_numbers<[1], [0], [0], [1], [0, 0, 1, 1], [], []>} : vector<16x32xf32>, vector<32x32xf32>, vector<16x32xf32> -> vector<16x32xf32>
    %42 = vector.broadcast %33 : vector<1x32xf32> to vector<16x32xf32>
    %43 = arith.addf %42, %41 : vector<16x32xf32>
    %c32 = arith.constant 32 : index
    %c0_13 = arith.constant 0 : index
    %44 = vector.load %arg3[%c32, %c0_13] : memref<264x32xf32, #tpu.memory_space<vmem>>, vector<32x32xf32>
    %c1_i32_14 = arith.constant 1 : i32
    %45 = tpu.dynamic_rotate %2 by %c1_i32_14 dim 0 : vector<16x32xf32>, i32 -> vector<16x32xf32>
    %46 = vector.broadcast %27 : vector<16x1xf32> to vector<16x32xf32>
    %47 = arith.mulf %45, %46 : vector<16x32xf32>
    %cst_15 = arith.constant dense<0.000000e+00> : vector<16x32xf32>
    %48 = tpu.matmul %47, %44, %cst_15 {dimension_numbers = #tpu.dot_dimension_numbers<[1], [0], [0], [1], [0, 0, 1, 1], [], []>} : vector<16x32xf32>, vector<32x32xf32>, vector<16x32xf32> -> vector<16x32xf32>
    %49 = arith.addf %43, %48 : vector<16x32xf32>
    %c64 = arith.constant 64 : index
    %c0_16 = arith.constant 0 : index
    %50 = vector.load %arg3[%c64, %c0_16] : memref<264x32xf32, #tpu.memory_space<vmem>>, vector<32x32xf32>
    %cst_17 = arith.constant dense<0.000000e+00> : vector<16x32xf32>
    %51 = tpu.matmul %2, %50, %cst_17 {dimension_numbers = #tpu.dot_dimension_numbers<[1], [0], [0], [1], [0, 0, 1, 1], [], []>} : vector<16x32xf32>, vector<32x32xf32>, vector<16x32xf32> -> vector<16x32xf32>
    %52 = arith.addf %49, %51 : vector<16x32xf32>
    %cst_18 = arith.constant 0.000000e+00 : f32
    %53 = vector.broadcast %cst_18 : f32 to vector<16x32xf32>
    %54 = arith.maximumf %52, %53 : vector<16x32xf32>
    %c192 = arith.constant 192 : index
    %c0_19 = arith.constant 0 : index
    %55 = vector.load %arg3[%c192, %c0_19] : memref<264x32xf32, #tpu.memory_space<vmem>>, vector<32x32xf32>
    %cst_20 = arith.constant dense<0.000000e+00> : vector<16x32xf32>
    %56 = tpu.matmul %54, %55, %cst_20 {dimension_numbers = #tpu.dot_dimension_numbers<[1], [0], [0], [1], [0, 0, 1, 1], [], []>} : vector<16x32xf32>, vector<32x32xf32>, vector<16x32xf32> -> vector<16x32xf32>
    %57 = vector.broadcast %35 : vector<1x32xf32> to vector<16x32xf32>
    %58 = arith.addf %56, %57 : vector<16x32xf32>
    %c96 = arith.constant 96 : index
    %c0_21 = arith.constant 0 : index
    %59 = vector.load %arg3[%c96, %c0_21] : memref<264x32xf32, #tpu.memory_space<vmem>>, vector<32x32xf32>
    %c2_i32_22 = arith.constant 2 : i32
    %60 = tpu.dynamic_rotate %58 by %c2_i32_22 dim 0 : vector<16x32xf32>, i32 -> vector<16x32xf32>
    %61 = vector.broadcast %31 : vector<16x1xf32> to vector<16x32xf32>
    %62 = arith.mulf %60, %61 : vector<16x32xf32>
    %cst_23 = arith.constant dense<0.000000e+00> : vector<16x32xf32>
    %63 = tpu.matmul %62, %59, %cst_23 {dimension_numbers = #tpu.dot_dimension_numbers<[1], [0], [0], [1], [0, 0, 1, 1], [], []>} : vector<16x32xf32>, vector<32x32xf32>, vector<16x32xf32> -> vector<16x32xf32>
    %64 = vector.broadcast %34 : vector<1x32xf32> to vector<16x32xf32>
    %65 = arith.addf %64, %63 : vector<16x32xf32>
    %c128 = arith.constant 128 : index
    %c0_24 = arith.constant 0 : index
    %66 = vector.load %arg3[%c128, %c0_24] : memref<264x32xf32, #tpu.memory_space<vmem>>, vector<32x32xf32>
    %c1_i32_25 = arith.constant 1 : i32
    %67 = tpu.dynamic_rotate %58 by %c1_i32_25 dim 0 : vector<16x32xf32>, i32 -> vector<16x32xf32>
    %68 = vector.broadcast %27 : vector<16x1xf32> to vector<16x32xf32>
    %69 = arith.mulf %67, %68 : vector<16x32xf32>
    %cst_26 = arith.constant dense<0.000000e+00> : vector<16x32xf32>
    %70 = tpu.matmul %69, %66, %cst_26 {dimension_numbers = #tpu.dot_dimension_numbers<[1], [0], [0], [1], [0, 0, 1, 1], [], []>} : vector<16x32xf32>, vector<32x32xf32>, vector<16x32xf32> -> vector<16x32xf32>
    %71 = arith.addf %65, %70 : vector<16x32xf32>
    %c160 = arith.constant 160 : index
    %c0_27 = arith.constant 0 : index
    %72 = vector.load %arg3[%c160, %c0_27] : memref<264x32xf32, #tpu.memory_space<vmem>>, vector<32x32xf32>
    %cst_28 = arith.constant dense<0.000000e+00> : vector<16x32xf32>
    %73 = tpu.matmul %58, %72, %cst_28 {dimension_numbers = #tpu.dot_dimension_numbers<[1], [0], [0], [1], [0, 0, 1, 1], [], []>} : vector<16x32xf32>, vector<32x32xf32>, vector<16x32xf32> -> vector<16x32xf32>
    %74 = arith.addf %71, %73 : vector<16x32xf32>
    %cst_29 = arith.constant 0.000000e+00 : f32
    %75 = vector.broadcast %cst_29 : f32 to vector<16x32xf32>
    %76 = arith.maximumf %74, %75 : vector<16x32xf32>
    %c224 = arith.constant 224 : index
    %c0_30 = arith.constant 0 : index
    %77 = vector.load %arg3[%c224, %c0_30] : memref<264x32xf32, #tpu.memory_space<vmem>>, vector<32x32xf32>
    %cst_31 = arith.constant dense<0.000000e+00> : vector<16x32xf32>
    %78 = tpu.matmul %76, %77, %cst_31 {dimension_numbers = #tpu.dot_dimension_numbers<[1], [0], [0], [1], [0, 0, 1, 1], [], []>} : vector<16x32xf32>, vector<32x32xf32>, vector<16x32xf32> -> vector<16x32xf32>
    %79 = vector.broadcast %36 : vector<1x32xf32> to vector<16x32xf32>
    %80 = arith.addf %78, %79 : vector<16x32xf32>
    %81 = arith.addf %58, %80 : vector<16x32xf32>
    %82 = vector.extract_strided_slice %81 {offsets = [8, 0], sizes = [8, 32], strides = [1, 1]} : vector<16x32xf32> to vector<8x32xf32>
    %c0_32 = arith.constant 0 : index
    %c0_33 = arith.constant 0 : index
    %83 = vector.load %arg4[%c0_32, %c0_33] : memref<8x32xf32, #tpu.memory_space<vmem>>, vector<8x32xf32>
    tpu.vector_store %arg4[%c0_32, %c0_33], %82 {strides = array<i32>} : memref<8x32xf32, #tpu.memory_space<vmem>>, vector<8x32xf32>,
    return
  }
  func.func @transform_0(%arg0: i32) -> (i32, i32) {
    %c1_i32 = arith.constant 1 : i32
    %0 = arith.muli %arg0, %c1_i32 : i32
    %c1_i32_0 = arith.constant 1 : i32
    %1 = arith.subi %0, %c1_i32_0 : i32
    %c0_i32 = arith.constant 0 : i32
    %2 = arith.maxsi %1, %c0_i32 : i32
    %c0_i32_1 = arith.constant 0 : i32
    %c0_i32_2 = arith.constant 0 : i32
    return %2, %c0_i32_1 : i32, i32
  }
  func.func @transform_1(%arg0: i32) -> (i32, i32) {
    %c0_i32 = arith.constant 0 : i32
    %c0_i32_0 = arith.constant 0 : i32
    return %arg0, %c0_i32 : i32, i32
  }
  func.func @transform_2(%arg0: i32) -> (i32, i32) {
    %c0_i32 = arith.constant 0 : i32
    %c0_i32_0 = arith.constant 0 : i32
    %c0_i32_1 = arith.constant 0 : i32
    return %c0_i32, %c0_i32_0 : i32, i32
  }
  func.func @transform_3(%arg0: i32) -> (i32, i32) {
    %c0_i32 = arith.constant 0 : i32
    %c0_i32_0 = arith.constant 0 : i32
    return %arg0, %c0_i32 : i32, i32
  }
}

</mosaic_0001>

<llo_original>
// kernel: anticipation_forward.1
$region0: #{anticipation_forward.1}
  #allocation0 [shape = 'u32[]', space=smem, size = 0x4, offset = 0x4, fixed_abs, tag = 'smem constant byte address 0x4 - core index']
  #allocation1 [shape = 'u32[144,128]{1,0:T(1,128)}', space=vmem, size = 0x12000, scoped, tag = 'internal scratch']
  %s0 = inlined_call_operand.vmem [shape: f32[16,32], index: 0, kind: input, shape index: {}, may-alias: {0,1}]
  %s1 = inlined_call_operand.vmem [shape: f32[16,32], index: 1, kind: input, shape index: {}, may-alias: {0,1}]
  %s2 = inlined_call_operand.vmem [shape: f32[264,32], index: 2, kind: input, shape index: {}]
  %s3 = inlined_call_operand.vmem [shape: f32[16,32], index: 3, kind: output, shape index: {}]
  %s4 = sld [smem:[#allocation0]]
  $region45: #{anticipation_forward.1} parent=0
    _
  %s6 = ssub.s32 1, %s4
  %s7 = scalar_select 0, %s6, %s4
  loop: start=0, step=1, limit=4
  $region2: #{anticipation_forward.1} parent=0 // loop_pre_header
    _
  $region3: #{anticipation_forward.1} parent=0 // loop_header
    %s9 = sphi 0, %s13
    %p10 = scmp.ge.s32.totalorder %s9, 4
    %s25 = sphi 0, %s27
    %s28 = sphi 0, %s25
    %s29 = sphi 0, %s28
    %s45 = sphi 0, %s29
    %s51 = sphi 0, %s53
    %s54 = sphi 0, %s51
    %s55 = sphi 0, %s54
    %s71 = sphi 0, %s55
    %s75 = sphi 0, %s75
    %s77 = sphi 0, %s75
    %s78 = sphi 0, %s77
    %s92 = sphi 0, %s78
    %s98 = sphi 0, %s100
    %s101 = sphi 0, %s98
    %s102 = sphi 0, %s101
    %s118 = sphi 0, %s102
  $region4: #{anticipation_forward.1} parent=0 // loop_header_branch
    %12 = sbr.rel (%p10) target = $region8
  $region5: #{anticipation_forward.1} parent=0 // loop_body
    %s14 = ssub.s32 %s9, 1
    %s15 = ssub.s32 %s9, 2
    %s16 = sadd.s32 %s9, 1
    %s17 = ssub.s32 %s9, 1
    %p18 = scmp.gt.s32.totalorder %s17, 0
    %s19 = scalar_select %p18, %s17, 0
    %s20 = ssub.s32 %s16, 1
    %p21 = scmp.gt.s32.totalorder %s20, 0
    %s22 = scalar_select %p21, %s20, 0
    %s23 = ssub.s32 %s19, %s22
    %p24 = scmp.eq.s32.totalorder %s23, 0
    %s26 = sadd.s32 %s25, 1
    %s27 = scalar_select %p24, %s25, %s26
    %p30 = pneg %p24
    %p31 = scmp.eq.s32.totalorder %s9, 1
    %p32 = por %p30, %p31
    %p33 = scmp.ne.s32.totalorder %s25, %s28
    %p34 = scmp.eq.s32.totalorder %s9, 0
    %p35 = por %p33, %p34
    %p36 = scmp.ne.s32.totalorder %s25, %s28
    %p37 = scmp.eq.s32.totalorder %s14, 1
    %p38 = por %p36, %p37
    %p39 = scmp.ne.s32.totalorder %s28, %s29
    %p40 = scmp.eq.s32.totalorder %s14, 0
    %p41 = por %p39, %p40
    %p42 = scmp.ne.s32.totalorder %s28, %s29
    %p43 = scmp.eq.s32.totalorder %s15, 1
    %p44 = por %p42, %p43
    %p46 = scmp.ne.s32.totalorder %s29, %s45
    %p47 = scmp.eq.s32.totalorder %s15, 0
    %p48 = por %p46, %p47
    %s49 = ssub.s32 %s9, %s16
    %p50 = scmp.eq.s32.totalorder %s49, 0
    %s52 = sadd.s32 %s51, 1
    %s53 = scalar_select %p50, %s51, %s52
    %p56 = pneg %p50
    %p57 = scmp.eq.s32.totalorder %s9, 1
    %p58 = por %p56, %p57
    %p59 = scmp.ne.s32.totalorder %s51, %s54
    %p60 = scmp.eq.s32.totalorder %s9, 0
    %p61 = por %p59, %p60
    %p62 = scmp.ne.s32.totalorder %s51, %s54
    %p63 = scmp.eq.s32.totalorder %s14, 1
    %p64 = por %p62, %p63
    %p65 = scmp.ne.s32.totalorder %s54, %s55
    %p66 = scmp.eq.s32.totalorder %s14, 0
    %p67 = por %p65, %p66
    %p68 = scmp.ne.s32.totalorder %s54, %s55
    %p69 = scmp.eq.s32.totalorder %s15, 1
    %p70 = por %p68, %p69
    %p72 = scmp.ne.s32.totalorder %s55, %s71
    %p73 = scmp.eq.s32.totalorder %s15, 0
    %p74 = por %p72, %p73
    %s76 = sadd.s32 %s75, 1
    %p79 = scmp.eq.s32.totalorder %s9, 1
    %p80 = scmp.ne.s32.totalorder %s75, %s77
    %p81 = scmp.eq.s32.totalorder %s9, 0
    %p82 = por %p80, %p81
    %p83 = scmp.ne.s32.totalorder %s75, %s77
    %p84 = scmp.eq.s32.totalorder %s14, 1
    %p85 = por %p83, %p84
    %p86 = scmp.ne.s32.totalorder %s77, %s78
    %p87 = scmp.eq.s32.totalorder %s14, 0
    %p88 = por %p86, %p87
    %p89 = scmp.ne.s32.totalorder %s77, %s78
    %p90 = scmp.eq.s32.totalorder %s15, 1
    %p91 = por %p89, %p90
    %p93 = scmp.ne.s32.totalorder %s78, %s92
    %p94 = scmp.eq.s32.totalorder %s15, 0
    %p95 = por %p93, %p94
    %s96 = ssub.s32 %s9, %s16
    %p97 = scmp.eq.s32.totalorder %s96, 0
    %s99 = sadd.s32 %s98, 1
    %s100 = scalar_select %p97, %s98, %s99
    %p103 = pneg %p97
    %p104 = scmp.eq.s32.totalorder %s9, 1
    %p105 = por %p103, %p104
    %p106 = scmp.ne.s32.totalorder %s98, %s101
    %p107 = scmp.eq.s32.totalorder %s9, 0
    %p108 = por %p106, %p107
    %p109 = scmp.ne.s32.totalorder %s98, %s101
    %p110 = scmp.eq.s32.totalorder %s14, 1
    %p111 = por %p109, %p110
    %p112 = scmp.ne.s32.totalorder %s101, %s102
    %p113 = scmp.eq.s32.totalorder %s14, 0
    %p114 = por %p112, %p113
    %p115 = scmp.ne.s32.totalorder %s101, %s102
    %p116 = scmp.eq.s32.totalorder %s15, 1
    %p117 = por %p115, %p116
    %p119 = scmp.ne.s32.totalorder %s102, %s118
    %p120 = scmp.eq.s32.totalorder %s15, 0
    %p121 = por %p119, %p120
    %p122 = scmp.le.s32.totalorder 1, %s9
    %p123 = scmp.lt.s32.totalorder %s9, 3
    %p124 = pnand %p122, %p123
    %p125 = pneg %p124
    // Predicated region
    $region9: #{anticipation_forward.1} parent=5 // pred_check
      _
    $region10: #{anticipation_forward.1} parent=5 // pred_check_branch
      %127 = sbr.rel (%p124) target = $region12
    $region11: #{anticipation_forward.1} parent=5 // pred_region
      %s128 = ssub.s32 %s9, 1
      // Predicated region
      $region13: #{anticipation_forward.1} parent=11 // pred_check
        %p129 = pneg %p88
      $region14: #{anticipation_forward.1} parent=11 // pred_check_branch
        %131 = sbr.rel (%p129) target = $region16
      $region15: #{anticipation_forward.1} parent=11 // pred_region
        _
      $region16: #{anticipation_forward.1} parent=11 // pred_fallthru
        _
    $region12: #{anticipation_forward.1} parent=5 // pred_fallthru
      _
    %p132 = scmp.lt.s32.totalorder %s9, 2
    // Predicated region
    $region17: #{anticipation_forward.1} parent=5 // pred_check
      %p133 = pneg %p132
    $region18: #{anticipation_forward.1} parent=5 // pred_check_branch
      %135 = sbr.rel (%p133) target = $region20
    $region19: #{anticipation_forward.1} parent=5 // pred_region
      // Predicated region
      $region21: #{anticipation_forward.1} parent=19 // pred_check
        %p136 = pneg %p35
      $region22: #{anticipation_forward.1} parent=19 // pred_check_branch
        %138 = sbr.rel (%p136) target = $region24
      $region23: #{anticipation_forward.1} parent=19 // pred_region
        %s139 = ssub.s32 %s9, 1
        %p140 = scmp.gt.s32.totalorder %s139, 0
        %s141 = scalar_select %p140, %s139, 0
        %p142 = scmp.lt.s32.totalorder %s141, 1
        %s143 = scalar_select %p142, %s141, 1
        %s144 = smul.addr %s143, 8
        %s145 = scalar_lea.vmem %s0, %s144
        %s146 = ssub.s32 %s9, 1
        %p147 = scmp.gt.s32.totalorder %s146, 0
        %s148 = scalar_select %p147, %s146, 0
      $region24: #{anticipation_forward.1} parent=19 // pred_fallthru
        _
      // Predicated region
      $region25: #{anticipation_forward.1} parent=19 // pred_check
        %p149 = pneg %p61
      $region26: #{anticipation_forward.1} parent=19 // pred_check_branch
        %151 = sbr.rel (%p149) target = $region28
      $region27: #{anticipation_forward.1} parent=19 // pred_region
        %p152 = scmp.lt.s32.totalorder %s9, 1
        %s153 = scalar_select %p152, %s9, 1
        %s154 = smul.addr %s153, 8
        %s155 = scalar_lea.vmem %s1, %s154
      $region28: #{anticipation_forward.1} parent=19 // pred_fallthru
        _
    $region20: #{anticipation_forward.1} parent=5 // pred_fallthru
      _
    %p156 = scmp.le.s32.totalorder 1, %s9
    %p157 = scmp.lt.s32.totalorder %s9, 3
    %p158 = pnand %p156, %p157
    %p159 = pneg %p158
    // Predicated region
    $region29: #{anticipation_forward.1} parent=5 // pred_check
      _
    $region30: #{anticipation_forward.1} parent=5 // pred_check_branch
      %161 = sbr.rel (%p158) target = $region32
    $region31: #{anticipation_forward.1} parent=5 // pred_region
      %s162 = ssub.s32 %s9, 1
      %s163 = ssub.s32 %s14, 1
      %p164 = scmp.gt.s32.totalorder %s163, 0
      %s165 = scalar_select %p164, %s163, 0
      %p166 = scmp.lt.s32.totalorder %s165, 1
      %s167 = scalar_select %p166, %s165, 1
      %s168 = smul.addr %s167, 8
      %s169 = scalar_lea.vmem %s0, %s168
      %p170 = pneg %p41
      %p171 = pneg %p38
      %p172 = scmp.lt.s32.totalorder %s14, 1
      %s173 = scalar_select %p172, %s14, 1
      %s174 = smul.addr %s173, 8
      %s175 = scalar_lea.vmem %s1, %s174
      %p176 = pneg %p67
      %p177 = pneg %p64
      %p178 = pneg %p88
      %p179 = pneg %p85
      %p180 = pneg %p114
      %p181 = pneg %p111
      %p182 = scmp.lt.s32.totalorder %s14, 1
      %s183 = scalar_select %p182, %s14, 1
      %s184 = smul.addr %s183, 8
      %s185 = scalar_lea.vmem %s3, %s184
      %s186 = ssub.s32 %s14, 1
      %p187 = scmp.gt.s32.totalorder %s186, 0
      %s188 = scalar_select %p187, %s186, 0
      %p189 = scmp.lt.s32.totalorder %s188, 1
      %s190 = scalar_select %p189, %s188, 1
      %s191 = smul.addr %s190, 8
      %s192 = scalar_lea.vmem %s0, %s191
      %s193 = ssub.s32 %s14, 1
      %p194 = scmp.gt.s32.totalorder %s193, 0
      %s195 = scalar_select %p194, %s193, 0
      %p196 = scmp.lt.s32.totalorder %s14, 1
      %s197 = scalar_select %p196, %s14, 1
      %s198 = smul.addr %s197, 8
      %s199 = scalar_lea.vmem %s1, %s198
      %p200 = scmp.lt.s32.totalorder %s14, 1
      %s201 = scalar_select %p200, %s14, 1
      %s202 = smul.addr %s201, 8
      %s203 = scalar_lea.vmem %s3, %s202
      %v204 = vld [vmem:[%s192] sm:$0xff]
      %v205 = vld [vmem:[%s199] sm:$0xff]
      %s206 = smul.u32 %s14, 8
      %s207 = ssub.s32 %s206, 8
      %v208 = vlaneseq
      %v209 = vshrl.u32 %v208, 7
      %v210 = vadd.s32 %v209, 8
      %v211 = vstv %s207
      %v212 = vadd.s32 %v211, %v209
      %v213 = vadd.s32 %v211, %v210
      %vm214 = vcmp.lt.s32.totalorder %v212, 0
      %v215 = vsub.s32 0, %v212
      %v216 = vsel %vm214, %v215, %v212
      %v217 = vshrl.u32 %v216, 3
      %v218 = vand.u32 %v216, 7
      %v219 = vsub.s32 0, %v218
      %v220 = vsel %vm214, %v219, %v218
      %vm221 = vcmp.lt.s32.totalorder %v213, 0
      %v222 = vsub.s32 0, %v213
      %v223 = vsel %vm221, %v222, %v213
      %v224 = vshrl.u32 %v223, 3
      %v225 = vand.u32 %v223, 7
      %v226 = vsub.s32 0, %v225
      %v227 = vsel %vm221, %v226, %v225
      %vm228 = vcmp.ne.s32.totalorder %v220, 0
      %vm229 = vcmp.ne.s32.totalorder %v227, 0
      %vm230 = vcmp.lt.s32.totalorder %v220, 0
      %vm231 = vcmp.lt.s32.totalorder %v227, 0
      %vm232 = vmand %vm230, %vm228
      %vm233 = vmand %vm231, %vm229
      %v234 = vadd.s32 %v220, 8
      %v235 = vadd.s32 %v227, 8
      %v236 = vsel %vm232, %v234, %v220
      %v237 = vsel %vm233, %v235, %v227
      %vm238 = vcmp.ge.s32.totalorder %v236, 1
      %vm239 = vcmp.ge.s32.totalorder %v237, 1
      %v240 = vsel %vm238, 1, 0
      %v241 = vsel %vm239, 1, 0
      %v242 = vcvt.s32.f32 %v240
      %v243 = vcvt.s32.f32 %v241
      %vm244 = vcmp.ge.s32.totalorder %v236, 2
      %vm245 = vcmp.ge.s32.totalorder %v237, 2
      %v246 = vsel %vm244, 1, 0
      %v247 = vsel %vm245, 1, 0
      %v248 = vcvt.s32.f32 %v246
      %v249 = vcvt.s32.f32 %v247
      %v250 = vld [vmem:[%s2 + $0x100] sm:$0xff]
      %v251 = vld [vmem:[%s2] sm:$0xff]
      %v252 = vld [vmem:[%s2 + $0x8] sm:$0xff]
      %v253 = vld [vmem:[%s2 + $0x10] sm:$0xff]
      %v254 = vld [vmem:[%s2 + $0x18] sm:$0xff]
      %v255 = vrot.slane %v204, 6
      %v256 = vrot.slane %v205, 6
      %vm257 = vcmp.lt.s32.totalorder %v209, 2
      %v258 = vsel %vm257, %v255, %v256
      %v259 = vsel %vm257, %v256, %v255
      %v260 = vmul.f32 %v259, %v248
      %v261 = vmul.f32 %v258, %v249
      %vm262 = vcmask 261120
      %v264 = vsel %vm262, %v260, 0
      %v267 = vsel %vm262, %v261, 0
      %269 = vmatprep.subr.mxu0 0.0
      %270 = vmatpush1.msra.mxu0 0.0
      %271 = vmatprep.subr.mxu0 0.0
      %272 = vmatpush1.msra.mxu0 0.0
      %273 = vmatprep.subr.mxu0 0.0
      %274 = vmatpush1.msra.mxu0 0.0
      %275 = vmatprep.subr.mxu0 0.0
      %276 = vmatpush1.msra.mxu0 0.0
      %277 = vmatprep.subr.mxu0 0.0
      %278 = vmatpush1.msra.mxu0 0.0
      %279 = vmatprep.subr.mxu0 0.0
      %280 = vmatpush1.msra.mxu0 0.0
      %281 = vmatprep.subr.mxu0 0.0
      %282 = vmatpush1.msra.mxu0 0.0
      %283 = vmatprep.subr.mxu0 0.0
      %284 = vmatpush1.msra.mxu0 0.0
      %285 = vmatprep.subr.mxu0 0.0
      %286 = vmatpush1.msra.mxu0 0.0
      %287 = vmatprep.subr.mxu0 0.0
      %288 = vmatpush1.msra.mxu0 0.0
      %289 = vmatprep.subr.mxu0 0.0
      %290 = vmatpush1.msra.mxu0 0.0
      %291 = vmatprep.subr.mxu0 0.0
      %292 = vmatpush1.msra.mxu0 0.0
      %293 = vmatprep.subr.mxu0 0.0
      %294 = vmatpush1.msra.mxu0 %v254
      %295 = vmatprep.subr.mxu0 0.0
      %296 = vmatpush1.msra.mxu0 %v253
      %297 = vmatprep.subr.mxu0 0.0
      %298 = vmatpush1.msra.mxu0 %v252
      %299 = vmatprep.subr.mxu0 0.0
      %300 = vmatpush1.msra.mxu0 %v251
      %301 = vmatprep.subr.mxu0 0.0
      %302 = vmatpush2.msra.mxu0 0.0
      %303 = vmatprep.subr.mxu0 0.0
      %304 = vmatpush2.msra.mxu0 0.0
      %305 = vmatprep.subr.mxu0 0.0
      %306 = vmatpush2.msra.mxu0 0.0
      %307 = vmatprep.subr.mxu0 0.0
      %308 = vmatpush2.msra.mxu0 0.0
      %309 = vmatprep.subr.mxu0 0.0
      %310 = vmatpush2.msra.mxu0 0.0
      %311 = vmatprep.subr.mxu0 0.0
      %312 = vmatpush2.msra.mxu0 0.0
      %313 = vmatprep.subr.mxu0 0.0
      %314 = vmatpush2.msra.mxu0 0.0
      %315 = vmatprep.subr.mxu0 0.0
      %316 = vmatpush2.msra.mxu0 0.0
      %317 = vmatprep.subr.mxu0 0.0
      %318 = vmatpush2.msra.mxu0 0.0
      %319 = vmatprep.subr.mxu0 0.0
      %320 = vmatpush2.msra.mxu0 0.0
      %321 = vmatprep.subr.mxu0 0.0
      %322 = vmatpush2.msra.mxu0 0.0
      %323 = vmatprep.subr.mxu0 0.0
      %324 = vmatpush2.msra.mxu0 0.0
      %325 = vmatprep.subr.mxu0 0.0
      %326 = vmatpush2.msra.mxu0 0.0
      %327 = vmatprep.subr.mxu0 0.0
      %328 = vmatpush2.msra.mxu0 0.0
      %329 = vmatprep.subr.mxu0 0.0
      %330 = vmatpush2.msra.mxu0 0.0
      %331 = vmatprep.subr.mxu0 0.0
      %332 = vmatpush2.msra.mxu0 0.0
      %333 = vmatprep.mubr.f32.mxu0 0.0
      %334 = vmatmul.mubr.f32.gmra.mxu0 %v264
      %v335 = vpop.f32.mrf.mxu0
      %v336 = vadd.f32 0.0, %v335
      %v337 = vpop.f32.mrf.mxu0
      %338 = vmatprep.mubr.f32.mxu0 0.0
      %339 = vmatmul.mubr.f32.gmra.mxu0 %v267
      %v340 = vpop.f32.mrf.mxu0
      %v341 = vadd.f32 0.0, %v340
      %v342 = vpop.f32.mrf.mxu0
      %343 = vdwg.mxu0
      %v344 = vlaneseq
      %v345 = vshrl.u32 %v344, 7
      %v346 = vsub.s32 0, %v345
      %v347 = vrot.slane %v250, %v346
      %v348 = vadd.f32 %v347, %v336
      %v349 = vadd.f32 %v347, %v341
      %v350 = vld [vmem:[%s2 + $0x20] sm:$0xff]
      %v351 = vld [vmem:[%s2 + $0x28] sm:$0xff]
      %v352 = vld [vmem:[%s2 + $0x30] sm:$0xff]
      %v353 = vld [vmem:[%s2 + $0x38] sm:$0xff]
      %v354 = vrot.slane %v204, 7
      %v355 = vrot.slane %v205, 7
      %vm356 = vcmp.lt.s32.totalorder %v209, 1
      %v357 = vsel %vm356, %v354, %v355
      %v358 = vsel %vm356, %v355, %v354
      %v359 = vmul.f32 %v358, %v242
      %v360 = vmul.f32 %v357, %v243
      %v362 = vsel %vm262, %v359, 0
      %v365 = vsel %vm262, %v360, 0
      %367 = vmatprep.subr.mxu0 0.0
      %368 = vmatpush1.msra.mxu0 0.0
      %369 = vmatprep.subr.mxu0 0.0
      %370 = vmatpush1.msra.mxu0 0.0
      %371 = vmatprep.subr.mxu0 0.0
      %372 = vmatpush1.msra.mxu0 0.0
      %373 = vmatprep.subr.mxu0 0.0
      %374 = vmatpush1.msra.mxu0 0.0
      %375 = vmatprep.subr.mxu0 0.0
      %376 = vmatpush1.msra.mxu0 0.0
      %377 = vmatprep.subr.mxu0 0.0
      %378 = vmatpush1.msra.mxu0 0.0
      %379 = vmatprep.subr.mxu0 0.0
      %380 = vmatpush1.msra.mxu0 0.0
      %381 = vmatprep.subr.mxu0 0.0
      %382 = vmatpush1.msra.mxu0 0.0
      %383 = vmatprep.subr.mxu0 0.0
      %384 = vmatpush1.msra.mxu0 0.0
      %385 = vmatprep.subr.mxu0 0.0
      %386 = vmatpush1.msra.mxu0 0.0
      %387 = vmatprep.subr.mxu0 0.0
      %388 = vmatpush1.msra.mxu0 0.0
      %389 = vmatprep.subr.mxu0 0.0
      %390 = vmatpush1.msra.mxu0 0.0
      %391 = vmatprep.subr.mxu0 0.0
      %392 = vmatpush1.msra.mxu0 %v353
      %393 = vmatprep.subr.mxu0 0.0
      %394 = vmatpush1.msra.mxu0 %v352
      %395 = vmatprep.subr.mxu0 0.0
      %396 = vmatpush1.msra.mxu0 %v351
      %397 = vmatprep.subr.mxu0 0.0
      %398 = vmatpush1.msra.mxu0 %v350
      %399 = vmatprep.subr.mxu0 0.0
      %400 = vmatpush2.msra.mxu0 0.0
      %401 = vmatprep.subr.mxu0 0.0
      %402 = vmatpush2.msra.mxu0 0.0
      %403 = vmatprep.subr.mxu0 0.0
      %404 = vmatpush2.msra.mxu0 0.0
      %405 = vmatprep.subr.mxu0 0.0
      %406 = vmatpush2.msra.mxu0 0.0
      %407 = vmatprep.subr.mxu0 0.0
      %408 = vmatpush2.msra.mxu0 0.0
      %409 = vmatprep.subr.mxu0 0.0
      %410 = vmatpush2.msra.mxu0 0.0
      %411 = vmatprep.subr.mxu0 0.0
      %412 = vmatpush2.msra.mxu0 0.0
      %413 = vmatprep.subr.mxu0 0.0
      %414 = vmatpush2.msra.mxu0 0.0
      %415 = vmatprep.subr.mxu0 0.0
      %416 = vmatpush2.msra.mxu0 0.0
      %417 = vmatprep.subr.mxu0 0.0
      %418 = vmatpush2.msra.mxu0 0.0
      %419 = vmatprep.subr.mxu0 0.0
      %420 = vmatpush2.msra.mxu0 0.0
      %421 = vmatprep.subr.mxu0 0.0
      %422 = vmatpush2.msra.mxu0 0.0
      %423 = vmatprep.subr.mxu0 0.0
      %424 = vmatpush2.msra.mxu0 0.0
      %425 = vmatprep.subr.mxu0 0.0
      %426 = vmatpush2.msra.mxu0 0.0
      %427 = vmatprep.subr.mxu0 0.0
      %428 = vmatpush2.msra.mxu0 0.0
      %429 = vmatprep.subr.mxu0 0.0
      %430 = vmatpush2.msra.mxu0 0.0
      %431 = vmatprep.mubr.f32.mxu0 0.0
      %432 = vmatmul.mubr.f32.gmra.mxu0 %v362
      %v433 = vpop.f32.mrf.mxu0
      %v434 = vadd.f32 0.0, %v433
      %v435 = vpop.f32.mrf.mxu0
      %436 = vmatprep.mubr.f32.mxu0 0.0
      %437 = vmatmul.mubr.f32.gmra.mxu0 %v365
      %v438 = vpop.f32.mrf.mxu0
      %v439 = vadd.f32 0.0, %v438
      %v440 = vpop.f32.mrf.mxu0
      %441 = vdwg.mxu0
      %v442 = vadd.f32 %v348, %v434
      %v443 = vadd.f32 %v349, %v439
      %v444 = vld [vmem:[%s2 + $0x40] sm:$0xff]
      %v445 = vld [vmem:[%s2 + $0x48] sm:$0xff]
      %v446 = vld [vmem:[%s2 + $0x50] sm:$0xff]
      %v447 = vld [vmem:[%s2 + $0x58] sm:$0xff]
      %v449 = vsel %vm262, %v204, 0
      %v452 = vsel %vm262, %v205, 0
      %454 = vmatprep.subr.mxu0 0.0
      %455 = vmatpush1.msra.mxu0 0.0
      %456 = vmatprep.subr.mxu0 0.0
      %457 = vmatpush1.msra.mxu0 0.0
      %458 = vmatprep.subr.mxu0 0.0
      %459 = vmatpush1.msra.mxu0 0.0
      %460 = vmatprep.subr.mxu0 0.0
      %461 = vmatpush1.msra.mxu0 0.0
      %462 = vmatprep.subr.mxu0 0.0
      %463 = vmatpush1.msra.mxu0 0.0
      %464 = vmatprep.subr.mxu0 0.0
      %465 = vmatpush1.msra.mxu0 0.0
      %466 = vmatprep.subr.mxu0 0.0
      %467 = vmatpush1.msra.mxu0 0.0
      %468 = vmatprep.subr.mxu0 0.0
      %469 = vmatpush1.msra.mxu0 0.0
      %470 = vmatprep.subr.mxu0 0.0
      %471 = vmatpush1.msra.mxu0 0.0
      %472 = vmatprep.subr.mxu0 0.0
      %473 = vmatpush1.msra.mxu0 0.0
      %474 = vmatprep.subr.mxu0 0.0
      %475 = vmatpush1.msra.mxu0 0.0
      %476 = vmatprep.subr.mxu0 0.0
      %477 = vmatpush1.msra.mxu0 0.0
      %478 = vmatprep.subr.mxu0 0.0
      %479 = vmatpush1.msra.mxu0 %v447
      %480 = vmatprep.subr.mxu0 0.0
      %481 = vmatpush1.msra.mxu0 %v446
      %482 = vmatprep.subr.mxu0 0.0
      %483 = vmatpush1.msra.mxu0 %v445
      %484 = vmatprep.subr.mxu0 0.0
      %485 = vmatpush1.msra.mxu0 %v444
      %486 = vmatprep.subr.mxu0 0.0
      %487 = vmatpush2.msra.mxu0 0.0
      %488 = vmatprep.subr.mxu0 0.0
      %489 = vmatpush2.msra.mxu0 0.0
      %490 = vmatprep.subr.mxu0 0.0
      %491 = vmatpush2.msra.mxu0 0.0
      %492 = vmatprep.subr.mxu0 0.0
      %493 = vmatpush2.msra.mxu0 0.0
      %494 = vmatprep.subr.mxu0 0.0
      %495 = vmatpush2.msra.mxu0 0.0
      %496 = vmatprep.subr.mxu0 0.0
      %497 = vmatpush2.msra.mxu0 0.0
      %498 = vmatprep.subr.mxu0 0.0
      %499 = vmatpush2.msra.mxu0 0.0
      %500 = vmatprep.subr.mxu0 0.0
      %501 = vmatpush2.msra.mxu0 0.0
      %502 = vmatprep.subr.mxu0 0.0
      %503 = vmatpush2.msra.mxu0 0.0
      %504 = vmatprep.subr.mxu0 0.0
      %505 = vmatpush2.msra.mxu0 0.0
      %506 = vmatprep.subr.mxu0 0.0
      %507 = vmatpush2.msra.mxu0 0.0
      %508 = vmatprep.subr.mxu0 0.0
      %509 = vmatpush2.msra.mxu0 0.0
      %510 = vmatprep.subr.mxu0 0.0
      %511 = vmatpush2.msra.mxu0 0.0
      %512 = vmatprep.subr.mxu0 0.0
      %513 = vmatpush2.msra.mxu0 0.0
      %514 = vmatprep.subr.mxu0 0.0
      %515 = vmatpush2.msra.mxu0 0.0
      %516 = vmatprep.subr.mxu0 0.0
      %517 = vmatpush2.msra.mxu0 0.0
      %518 = vmatprep.mubr.f32.mxu0 0.0
      %519 = vmatmul.mubr.f32.gmra.mxu0 %v449
      %v520 = vpop.f32.mrf.mxu0
      %v521 = vadd.f32 0.0, %v520
      %v522 = vpop.f32.mrf.mxu0
      %523 = vmatprep.mubr.f32.mxu0 0.0
      %524 = vmatmul.mubr.f32.gmra.mxu0 %v452
      %v525 = vpop.f32.mrf.mxu0
      %v526 = vadd.f32 0.0, %v525
      %v527 = vpop.f32.mrf.mxu0
      %528 = vdwg.mxu0
      %v529 = vadd.f32 %v442, %v521
      %v530 = vadd.f32 %v443, %v526
      %v531 = vmax.f32 %v529, 0.0
      %v532 = vmax.f32 %v530, 0.0
      %v533 = vld [vmem:[%s2 + $0xc0] sm:$0xff]
      %v534 = vld [vmem:[%s2 + $0xc8] sm:$0xff]
      %v535 = vld [vmem:[%s2 + $0xd0] sm:$0xff]
      %v536 = vld [vmem:[%s2 + $0xd8] sm:$0xff]
      %v537 = vlaneseq
      %v538 = vshrl.u32 %v537, 7
      %v539 = vsub.s32 2, %v538
      %v540 = vrot.slane %v250, %v539
      %v542 = vsel %vm262, %v531, 0
      %v545 = vsel %vm262, %v532, 0
      %547 = vmatprep.subr.mxu0 0.0
      %548 = vmatpush1.msra.mxu0 0.0
      %549 = vmatprep.subr.mxu0 0.0
      %550 = vmatpush1.msra.mxu0 0.0
      %551 = vmatprep.subr.mxu0 0.0
      %552 = vmatpush1.msra.mxu0 0.0
      %553 = vmatprep.subr.mxu0 0.0
      %554 = vmatpush1.msra.mxu0 0.0
      %555 = vmatprep.subr.mxu0 0.0
      %556 = vmatpush1.msra.mxu0 0.0
      %557 = vmatprep.subr.mxu0 0.0
      %558 = vmatpush1.msra.mxu0 0.0
      %559 = vmatprep.subr.mxu0 0.0
      %560 = vmatpush1.msra.mxu0 0.0
      %561 = vmatprep.subr.mxu0 0.0
      %562 = vmatpush1.msra.mxu0 0.0
      %563 = vmatprep.subr.mxu0 0.0
      %564 = vmatpush1.msra.mxu0 0.0
      %565 = vmatprep.subr.mxu0 0.0
      %566 = vmatpush1.msra.mxu0 0.0
      %567 = vmatprep.subr.mxu0 0.0
      %568 = vmatpush1.msra.mxu0 0.0
      %569 = vmatprep.subr.mxu0 0.0
      %570 = vmatpush1.msra.mxu0 0.0
      %571 = vmatprep.subr.mxu0 0.0
      %572 = vmatpush1.msra.mxu0 %v536
      %573 = vmatprep.subr.mxu0 0.0
      %574 = vmatpush1.msra.mxu0 %v535
      %575 = vmatprep.subr.mxu0 0.0
      %576 = vmatpush1.msra.mxu0 %v534
      %577 = vmatprep.subr.mxu0 0.0
      %578 = vmatpush1.msra.mxu0 %v533
      %579 = vmatprep.subr.mxu0 0.0
      %580 = vmatpush2.msra.mxu0 0.0
      %581 = vmatprep.subr.mxu0 0.0
      %582 = vmatpush2.msra.mxu0 0.0
      %583 = vmatprep.subr.mxu0 0.0
      %584 = vmatpush2.msra.mxu0 0.0
      %585 = vmatprep.subr.mxu0 0.0
      %586 = vmatpush2.msra.mxu0 0.0
      %587 = vmatprep.subr.mxu0 0.0
      %588 = vmatpush2.msra.mxu0 0.0
      %589 = vmatprep.subr.mxu0 0.0
      %590 = vmatpush2.msra.mxu0 0.0
      %591 = vmatprep.subr.mxu0 0.0
      %592 = vmatpush2.msra.mxu0 0.0
      %593 = vmatprep.subr.mxu0 0.0
      %594 = vmatpush2.msra.mxu0 0.0
      %595 = vmatprep.subr.mxu0 0.0
      %596 = vmatpush2.msra.mxu0 0.0
      %597 = vmatprep.subr.mxu0 0.0
      %598 = vmatpush2.msra.mxu0 0.0
      %599 = vmatprep.subr.mxu0 0.0
      %600 = vmatpush2.msra.mxu0 0.0
      %601 = vmatprep.subr.mxu0 0.0
      %602 = vmatpush2.msra.mxu0 0.0
      %603 = vmatprep.subr.mxu0 0.0
      %604 = vmatpush2.msra.mxu0 0.0
      %605 = vmatprep.subr.mxu0 0.0
      %606 = vmatpush2.msra.mxu0 0.0
      %607 = vmatprep.subr.mxu0 0.0
      %608 = vmatpush2.msra.mxu0 0.0
      %609 = vmatprep.subr.mxu0 0.0
      %610 = vmatpush2.msra.mxu0 0.0
      %611 = vmatprep.mubr.f32.mxu0 0.0
      %612 = vmatmul.mubr.f32.gmra.mxu0 %v542
      %v613 = vpop.f32.mrf.mxu0
      %v614 = vadd.f32 %v540, %v613
      %v615 = vpop.f32.mrf.mxu0
      %616 = vmatprep.mubr.f32.mxu0 0.0
      %617 = vmatmul.mubr.f32.gmra.mxu0 %v545
      %v618 = vpop.f32.mrf.mxu0
      %v619 = vadd.f32 %v540, %v618
      %v620 = vpop.f32.mrf.mxu0
      %621 = vdwg.mxu0
      %v622 = vld [vmem:[%s2 + $0x60] sm:$0xff]
      %v623 = vld [vmem:[%s2 + $0x68] sm:$0xff]
      %v624 = vld [vmem:[%s2 + $0x70] sm:$0xff]
      %v625 = vld [vmem:[%s2 + $0x78] sm:$0xff]
      %v626 = vrot.slane %v614, 6
      %v627 = vrot.slane %v619, 6
      %v628 = vsel %vm257, %v626, %v627
      %v629 = vsel %vm257, %v627, %v626
      %v630 = vmul.f32 %v629, %v248
      %v631 = vmul.f32 %v628, %v249
      %v633 = vsel %vm262, %v630, 0
      %v636 = vsel %vm262, %v631, 0
      %638 = vmatprep.subr.mxu0 0.0
      %639 = vmatpush1.msra.mxu0 0.0
      %640 = vmatprep.subr.mxu0 0.0
      %641 = vmatpush1.msra.mxu0 0.0
      %642 = vmatprep.subr.mxu0 0.0
      %643 = vmatpush1.msra.mxu0 0.0
      %644 = vmatprep.subr.mxu0 0.0
      %645 = vmatpush1.msra.mxu0 0.0
      %646 = vmatprep.subr.mxu0 0.0
      %647 = vmatpush1.msra.mxu0 0.0
      %648 = vmatprep.subr.mxu0 0.0
      %649 = vmatpush1.msra.mxu0 0.0
      %650 = vmatprep.subr.mxu0 0.0
      %651 = vmatpush1.msra.mxu0 0.0
      %652 = vmatprep.subr.mxu0 0.0
      %653 = vmatpush1.msra.mxu0 0.0
      %654 = vmatprep.subr.mxu0 0.0
      %655 = vmatpush1.msra.mxu0 0.0
      %656 = vmatprep.subr.mxu0 0.0
      %657 = vmatpush1.msra.mxu0 0.0
      %658 = vmatprep.subr.mxu0 0.0
      %659 = vmatpush1.msra.mxu0 0.0
      %660 = vmatprep.subr.mxu0 0.0
      %661 = vmatpush1.msra.mxu0 0.0
      %662 = vmatprep.subr.mxu0 0.0
      %663 = vmatpush1.msra.mxu0 %v625
      %664 = vmatprep.subr.mxu0 0.0
      %665 = vmatpush1.msra.mxu0 %v624
      %666 = vmatprep.subr.mxu0 0.0
      %667 = vmatpush1.msra.mxu0 %v623
      %668 = vmatprep.subr.mxu0 0.0
      %669 = vmatpush1.msra.mxu0 %v622
      %670 = vmatprep.subr.mxu0 0.0
      %671 = vmatpush2.msra.mxu0 0.0
      %672 = vmatprep.subr.mxu0 0.0
      %673 = vmatpush2.msra.mxu0 0.0
      %674 = vmatprep.subr.mxu0 0.0
      %675 = vmatpush2.msra.mxu0 0.0
      %676 = vmatprep.subr.mxu0 0.0
      %677 = vmatpush2.msra.mxu0 0.0
      %678 = vmatprep.subr.mxu0 0.0
      %679 = vmatpush2.msra.mxu0 0.0
      %680 = vmatprep.subr.mxu0 0.0
      %681 = vmatpush2.msra.mxu0 0.0
      %682 = vmatprep.subr.mxu0 0.0
      %683 = vmatpush2.msra.mxu0 0.0
      %684 = vmatprep.subr.mxu0 0.0
      %685 = vmatpush2.msra.mxu0 0.0
      %686 = vmatprep.subr.mxu0 0.0
      %687 = vmatpush2.msra.mxu0 0.0
      %688 = vmatprep.subr.mxu0 0.0
      %689 = vmatpush2.msra.mxu0 0.0
      %690 = vmatprep.subr.mxu0 0.0
      %691 = vmatpush2.msra.mxu0 0.0
      %692 = vmatprep.subr.mxu0 0.0
      %693 = vmatpush2.msra.mxu0 0.0
      %694 = vmatprep.subr.mxu0 0.0
      %695 = vmatpush2.msra.mxu0 0.0
      %696 = vmatprep.subr.mxu0 0.0
      %697 = vmatpush2.msra.mxu0 0.0
      %698 = vmatprep.subr.mxu0 0.0
      %699 = vmatpush2.msra.mxu0 0.0
      %700 = vmatprep.subr.mxu0 0.0
      %701 = vmatpush2.msra.mxu0 0.0
      %702 = vmatprep.mubr.f32.mxu0 0.0
      %703 = vmatmul.mubr.f32.gmra.mxu0 %v633
      %v704 = vpop.f32.mrf.mxu0
      %v705 = vadd.f32 0.0, %v704
      %v706 = vpop.f32.mrf.mxu0
      %707 = vmatprep.mubr.f32.mxu0 0.0
      %708 = vmatmul.mubr.f32.gmra.mxu0 %v636
      %v709 = vpop.f32.mrf.mxu0
      %v710 = vadd.f32 0.0, %v709
      %v711 = vpop.f32.mrf.mxu0
      %712 = vdwg.mxu0
      %v713 = vlaneseq
      %v714 = vshrl.u32 %v713, 7
      %v715 = vsub.s32 1, %v714
      %v716 = vrot.slane %v250, %v715
      %v717 = vadd.f32 %v716, %v705
      %v718 = vadd.f32 %v716, %v710
      %v719 = vld [vmem:[%s2 + $0x80] sm:$0xff]
      %v720 = vld [vmem:[%s2 + $0x88] sm:$0xff]
      %v721 = vld [vmem:[%s2 + $0x90] sm:$0xff]
      %v722 = vld [vmem:[%s2 + $0x98] sm:$0xff]
      %v723 = vrot.slane %v614, 7
      %v724 = vrot.slane %v619, 7
      %v725 = vsel %vm356, %v723, %v724
      %v726 = vsel %vm356, %v724, %v723
      %v727 = vmul.f32 %v726, %v242
      %v728 = vmul.f32 %v725, %v243
      %v730 = vsel %vm262, %v727, 0
      %v733 = vsel %vm262, %v728, 0
      %735 = vmatprep.subr.mxu0 0.0
      %736 = vmatpush1.msra.mxu0 0.0
      %737 = vmatprep.subr.mxu0 0.0
      %738 = vmatpush1.msra.mxu0 0.0
      %739 = vmatprep.subr.mxu0 0.0
      %740 = vmatpush1.msra.mxu0 0.0
      %741 = vmatprep.subr.mxu0 0.0
      %742 = vmatpush1.msra.mxu0 0.0
      %743 = vmatprep.subr.mxu0 0.0
      %744 = vmatpush1.msra.mxu0 0.0
      %745 = vmatprep.subr.mxu0 0.0
      %746 = vmatpush1.msra.mxu0 0.0
      %747 = vmatprep.subr.mxu0 0.0
      %748 = vmatpush1.msra.mxu0 0.0
      %749 = vmatprep.subr.mxu0 0.0
      %750 = vmatpush1.msra.mxu0 0.0
      %751 = vmatprep.subr.mxu0 0.0
      %752 = vmatpush1.msra.mxu0 0.0
      %753 = vmatprep.subr.mxu0 0.0
      %754 = vmatpush1.msra.mxu0 0.0
      %755 = vmatprep.subr.mxu0 0.0
      %756 = vmatpush1.msra.mxu0 0.0
      %757 = vmatprep.subr.mxu0 0.0
      %758 = vmatpush1.msra.mxu0 0.0
      %759 = vmatprep.subr.mxu0 0.0
      %760 = vmatpush1.msra.mxu0 %v722
      %761 = vmatprep.subr.mxu0 0.0
      %762 = vmatpush1.msra.mxu0 %v721
      %763 = vmatprep.subr.mxu0 0.0
      %764 = vmatpush1.msra.mxu0 %v720
      %765 = vmatprep.subr.mxu0 0.0
      %766 = vmatpush1.msra.mxu0 %v719
      %767 = vmatprep.subr.mxu0 0.0
      %768 = vmatpush2.msra.mxu0 0.0
      %769 = vmatprep.subr.mxu0 0.0
      %770 = vmatpush2.msra.mxu0 0.0
      %771 = vmatprep.subr.mxu0 0.0
      %772 = vmatpush2.msra.mxu0 0.0
      %773 = vmatprep.subr.mxu0 0.0
      %774 = vmatpush2.msra.mxu0 0.0
      %775 = vmatprep.subr.mxu0 0.0
      %776 = vmatpush2.msra.mxu0 0.0
      %777 = vmatprep.subr.mxu0 0.0
      %778 = vmatpush2.msra.mxu0 0.0
      %779 = vmatprep.subr.mxu0 0.0
      %780 = vmatpush2.msra.mxu0 0.0
      %781 = vmatprep.subr.mxu0 0.0
      %782 = vmatpush2.msra.mxu0 0.0
      %783 = vmatprep.subr.mxu0 0.0
      %784 = vmatpush2.msra.mxu0 0.0
      %785 = vmatprep.subr.mxu0 0.0
      %786 = vmatpush2.msra.mxu0 0.0
      %787 = vmatprep.subr.mxu0 0.0
      %788 = vmatpush2.msra.mxu0 0.0
      %789 = vmatprep.subr.mxu0 0.0
      %790 = vmatpush2.msra.mxu0 0.0
      %791 = vmatprep.subr.mxu0 0.0
      %792 = vmatpush2.msra.mxu0 0.0
      %793 = vmatprep.subr.mxu0 0.0
      %794 = vmatpush2.msra.mxu0 0.0
      %795 = vmatprep.subr.mxu0 0.0
      %796 = vmatpush2.msra.mxu0 0.0
      %797 = vmatprep.subr.mxu0 0.0
      %798 = vmatpush2.msra.mxu0 0.0
      %799 = vmatprep.mubr.f32.mxu0 0.0
      %800 = vmatmul.mubr.f32.gmra.mxu0 %v730
      %v801 = vpop.f32.mrf.mxu0
      %v802 = vadd.f32 0.0, %v801
      %v803 = vpop.f32.mrf.mxu0
      %804 = vmatprep.mubr.f32.mxu0 0.0
      %805 = vmatmul.mubr.f32.gmra.mxu0 %v733
      %v806 = vpop.f32.mrf.mxu0
      %v807 = vadd.f32 0.0, %v806
      %v808 = vpop.f32.mrf.mxu0
      %809 = vdwg.mxu0
      %v810 = vadd.f32 %v717, %v802
      %v811 = vadd.f32 %v718, %v807
      %v812 = vld [vmem:[%s2 + $0xa0] sm:$0xff]
      %v813 = vld [vmem:[%s2 + $0xa8] sm:$0xff]
      %v814 = vld [vmem:[%s2 + $0xb0] sm:$0xff]
      %v815 = vld [vmem:[%s2 + $0xb8] sm:$0xff]
      %v817 = vsel %vm262, %v614, 0
      %v820 = vsel %vm262, %v619, 0
      %822 = vmatprep.subr.mxu0 0.0
      %823 = vmatpush1.msra.mxu0 0.0
      %824 = vmatprep.subr.mxu0 0.0
      %825 = vmatpush1.msra.mxu0 0.0
      %826 = vmatprep.subr.mxu0 0.0
      %827 = vmatpush1.msra.mxu0 0.0
      %828 = vmatprep.subr.mxu0 0.0
      %829 = vmatpush1.msra.mxu0 0.0
      %830 = vmatprep.subr.mxu0 0.0
      %831 = vmatpush1.msra.mxu0 0.0
      %832 = vmatprep.subr.mxu0 0.0
      %833 = vmatpush1.msra.mxu0 0.0
      %834 = vmatprep.subr.mxu0 0.0
      %835 = vmatpush1.msra.mxu0 0.0
      %836 = vmatprep.subr.mxu0 0.0
      %837 = vmatpush1.msra.mxu0 0.0
      %838 = vmatprep.subr.mxu0 0.0
      %839 = vmatpush1.msra.mxu0 0.0
      %840 = vmatprep.subr.mxu0 0.0
      %841 = vmatpush1.msra.mxu0 0.0
      %842 = vmatprep.subr.mxu0 0.0
      %843 = vmatpush1.msra.mxu0 0.0
      %844 = vmatprep.subr.mxu0 0.0
      %845 = vmatpush1.msra.mxu0 0.0
      %846 = vmatprep.subr.mxu0 0.0
      %847 = vmatpush1.msra.mxu0 %v815
      %848 = vmatprep.subr.mxu0 0.0
      %849 = vmatpush1.msra.mxu0 %v814
      %850 = vmatprep.subr.mxu0 0.0
      %851 = vmatpush1.msra.mxu0 %v813
      %852 = vmatprep.subr.mxu0 0.0
      %853 = vmatpush1.msra.mxu0 %v812
      %854 = vmatprep.subr.mxu0 0.0
      %855 = vmatpush2.msra.mxu0 0.0
      %856 = vmatprep.subr.mxu0 0.0
      %857 = vmatpush2.msra.mxu0 0.0
      %858 = vmatprep.subr.mxu0 0.0
      %859 = vmatpush2.msra.mxu0 0.0
      %860 = vmatprep.subr.mxu0 0.0
      %861 = vmatpush2.msra.mxu0 0.0
      %862 = vmatprep.subr.mxu0 0.0
      %863 = vmatpush2.msra.mxu0 0.0
      %864 = vmatprep.subr.mxu0 0.0
      %865 = vmatpush2.msra.mxu0 0.0
      %866 = vmatprep.subr.mxu0 0.0
      %867 = vmatpush2.msra.mxu0 0.0
      %868 = vmatprep.subr.mxu0 0.0
      %869 = vmatpush2.msra.mxu0 0.0
      %870 = vmatprep.subr.mxu0 0.0
      %871 = vmatpush2.msra.mxu0 0.0
      %872 = vmatprep.subr.mxu0 0.0
      %873 = vmatpush2.msra.mxu0 0.0
      %874 = vmatprep.subr.mxu0 0.0
      %875 = vmatpush2.msra.mxu0 0.0
      %876 = vmatprep.subr.mxu0 0.0
      %877 = vmatpush2.msra.mxu0 0.0
      %878 = vmatprep.subr.mxu0 0.0
      %879 = vmatpush2.msra.mxu0 0.0
      %880 = vmatprep.subr.mxu0 0.0
      %881 = vmatpush2.msra.mxu0 0.0
      %882 = vmatprep.subr.mxu0 0.0
      %883 = vmatpush2.msra.mxu0 0.0
      %884 = vmatprep.subr.mxu0 0.0
      %885 = vmatpush2.msra.mxu0 0.0
      %886 = vmatprep.mubr.f32.mxu0 0.0
      %887 = vmatmul.mubr.f32.gmra.mxu0 %v817
      %v888 = vpop.f32.mrf.mxu0
      %v889 = vadd.f32 0.0, %v888
      %v890 = vpop.f32.mrf.mxu0
      %891 = vmatprep.mubr.f32.mxu0 0.0
      %892 = vmatmul.mubr.f32.gmra.mxu0 %v820
      %v893 = vpop.f32.mrf.mxu0
      %v894 = vadd.f32 0.0, %v893
      %v895 = vpop.f32.mrf.mxu0
      %896 = vdwg.mxu0
      %v897 = vadd.f32 %v810, %v889
      %v898 = vadd.f32 %v811, %v894
      %v899 = vmax.f32 %v897, 0.0
      %v900 = vmax.f32 %v898, 0.0
      %v901 = vld [vmem:[%s2 + $0xe0] sm:$0xff]
      %v902 = vld [vmem:[%s2 + $0xe8] sm:$0xff]
      %v903 = vld [vmem:[%s2 + $0xf0] sm:$0xff]
      %v904 = vld [vmem:[%s2 + $0xf8] sm:$0xff]
      %v905 = vlaneseq
      %v906 = vshrl.u32 %v905, 7
      %v907 = vsub.s32 3, %v906
      %v908 = vrot.slane %v250, %v907
      %v910 = vsel %vm262, %v899, 0
      %v913 = vsel %vm262, %v900, 0
      %915 = vmatprep.subr.mxu0 0.0
      %916 = vmatpush1.msra.mxu0 0.0
      %917 = vmatprep.subr.mxu0 0.0
      %918 = vmatpush1.msra.mxu0 0.0
      %919 = vmatprep.subr.mxu0 0.0
      %920 = vmatpush1.msra.mxu0 0.0
      %921 = vmatprep.subr.mxu0 0.0
      %922 = vmatpush1.msra.mxu0 0.0
      %923 = vmatprep.subr.mxu0 0.0
      %924 = vmatpush1.msra.mxu0 0.0
      %925 = vmatprep.subr.mxu0 0.0
      %926 = vmatpush1.msra.mxu0 0.0
      %927 = vmatprep.subr.mxu0 0.0
      %928 = vmatpush1.msra.mxu0 0.0
      %929 = vmatprep.subr.mxu0 0.0
      %930 = vmatpush1.msra.mxu0 0.0
      %931 = vmatprep.subr.mxu0 0.0
      %932 = vmatpush1.msra.mxu0 0.0
      %933 = vmatprep.subr.mxu0 0.0
      %934 = vmatpush1.msra.mxu0 0.0
      %935 = vmatprep.subr.mxu0 0.0
      %936 = vmatpush1.msra.mxu0 0.0
      %937 = vmatprep.subr.mxu0 0.0
      %938 = vmatpush1.msra.mxu0 0.0
      %939 = vmatprep.subr.mxu0 0.0
      %940 = vmatpush1.msra.mxu0 %v904
      %941 = vmatprep.subr.mxu0 0.0
      %942 = vmatpush1.msra.mxu0 %v903
      %943 = vmatprep.subr.mxu0 0.0
      %944 = vmatpush1.msra.mxu0 %v902
      %945 = vmatprep.subr.mxu0 0.0
      %946 = vmatpush1.msra.mxu0 %v901
      %947 = vmatprep.subr.mxu0 0.0
      %948 = vmatpush2.msra.mxu0 0.0
      %949 = vmatprep.subr.mxu0 0.0
      %950 = vmatpush2.msra.mxu0 0.0
      %951 = vmatprep.subr.mxu0 0.0
      %952 = vmatpush2.msra.mxu0 0.0
      %953 = vmatprep.subr.mxu0 0.0
      %954 = vmatpush2.msra.mxu0 0.0
      %955 = vmatprep.subr.mxu0 0.0
      %956 = vmatpush2.msra.mxu0 0.0
      %957 = vmatprep.subr.mxu0 0.0
      %958 = vmatpush2.msra.mxu0 0.0
      %959 = vmatprep.subr.mxu0 0.0
      %960 = vmatpush2.msra.mxu0 0.0
      %961 = vmatprep.subr.mxu0 0.0
      %962 = vmatpush2.msra.mxu0 0.0
      %963 = vmatprep.subr.mxu0 0.0
      %964 = vmatpush2.msra.mxu0 0.0
      %965 = vmatprep.subr.mxu0 0.0
      %966 = vmatpush2.msra.mxu0 0.0
      %967 = vmatprep.subr.mxu0 0.0
      %968 = vmatpush2.msra.mxu0 0.0
      %969 = vmatprep.subr.mxu0 0.0
      %970 = vmatpush2.msra.mxu0 0.0
      %971 = vmatprep.subr.mxu0 0.0
      %972 = vmatpush2.msra.mxu0 0.0
      %973 = vmatprep.subr.mxu0 0.0
      %974 = vmatpush2.msra.mxu0 0.0
      %975 = vmatprep.subr.mxu0 0.0
      %976 = vmatpush2.msra.mxu0 0.0
      %977 = vmatprep.subr.mxu0 0.0
      %978 = vmatpush2.msra.mxu0 0.0
      %979 = vmatprep.mubr.f32.mxu0 0.0
      %980 = vmatmul.mubr.f32.gmra.mxu0 %v910
      %v981 = vpop.f32.mrf.mxu0
      %v982 = vpop.f32.mrf.mxu0
      %983 = vmatprep.mubr.f32.mxu0 0.0
      %984 = vmatmul.mubr.f32.gmra.mxu0 %v913
      %v985 = vpop.f32.mrf.mxu0
      %v986 = vadd.f32 %v908, %v985
      %v987 = vpop.f32.mrf.mxu0
      %988 = vdwg.mxu0
      %v989 = vadd.f32 %v619, %v986
      %990 = vst.msk [vmem:[%s203] sm:$0xff] %vm262, %v989
      %p991 = scmp.lt.s32.totalorder %s14, 1
      %s992 = scalar_select %p991, %s14, 1
      %s993 = smul.addr %s992, 8
      %s994 = scalar_lea.vmem %s3, %s993
      // Predicated region
      $region33: #{anticipation_forward.1} parent=31 // pred_check
        %p995 = pneg %p111
      $region34: #{anticipation_forward.1} parent=31 // pred_check_branch
        %997 = sbr.rel (%p995) target = $region36
      $region35: #{anticipation_forward.1} parent=31 // pred_region
        _
      $region36: #{anticipation_forward.1} parent=31 // pred_fallthru
        _
    $region32: #{anticipation_forward.1} parent=5 // pred_fallthru
      _
    %p998 = scmp.le.s32.totalorder 2, %s9
    // Predicated region
    $region37: #{anticipation_forward.1} parent=5 // pred_check
      %p999 = pneg %p998
    $region38: #{anticipation_forward.1} parent=5 // pred_check_branch
      %1001 = sbr.rel (%p999) target = $region40
    $region39: #{anticipation_forward.1} parent=5 // pred_region
      %s1002 = ssub.s32 %s9, 2
      // Predicated region
      $region41: #{anticipation_forward.1} parent=39 // pred_check
        %p1003 = pneg %p117
      $region42: #{anticipation_forward.1} parent=39 // pred_check_branch
        %1005 = sbr.rel (%p1003) target = $region44
      $region43: #{anticipation_forward.1} parent=39 // pred_region
        %p1006 = scmp.lt.s32.totalorder %s15, 1
        %s1007 = scalar_select %p1006, %s15, 1
        %s1008 = smul.addr %s1007, 8
        %s1009 = scalar_lea.vmem %s3, %s1008
      $region44: #{anticipation_forward.1} parent=39 // pred_fallthru
        _
    $region40: #{anticipation_forward.1} parent=5 // pred_fallthru
      _
  $region6: #{anticipation_forward.1} parent=0 // loop_footer
    %s13 = sadd.s32 1, %s9
  $region7: #{anticipation_forward.1} parent=0 // loop_footer_branch
    %8 = sbr.rel target = $region3
  $region8: #{anticipation_forward.1} parent=0 // loop_exit
    _

</llo_original>
